<compile_context>
chip_gen: v7x
topology: tpu7x:2x2x1
jax: 0.10.0
libtpu: 0.0.40
codegen_flags: <defaults>
</compile_context>

<pallas_src>
import functools

import jax
import jax.numpy as jnp
from jax.experimental import pallas as pl
from jax.experimental.pallas import tpu as pltpu


# ---------------------------------------------------------------------------
# Hardware / feature probes and sizing helpers.
# ---------------------------------------------------------------------------
def _vmem_capacity_bytes():
    try:
        return int(pltpu.get_tpu_info().vmem_capacity_bytes)
    except Exception:
        return 64 << 20  # conservative fallback that no chip undershoots


@functools.lru_cache(maxsize=1)
def _single_buffer_weights_supported():
    """Probe whether pipeline_mode=pl.Buffered(1) works on this jax/libtpu."""
    try:
        def _probe(a_ref, b_ref, o_ref):
            o_ref[...] = a_ref[...] + b_ref[...]

        y = pl.pallas_call(
            _probe,
            grid=(2,),
            in_specs=[
                pl.BlockSpec((8, 128), lambda i: (0, 0),
                             pipeline_mode=pl.Buffered(1)),
                pl.BlockSpec((8, 128), lambda i: (i, 0)),
            ],
            out_specs=pl.BlockSpec((8, 128), lambda i: (i, 0)),
            out_shape=jax.ShapeDtypeStruct((16, 128), jnp.float32),
        )(jnp.zeros((8, 128), jnp.float32), jnp.zeros((16, 128), jnp.float32))
        jax.block_until_ready(y)
        return True
    except Exception:
        return False


def _const_spec(shape, single_buffer):
    """BlockSpec for a grid-invariant (weight) operand; single-buffer if possible."""
    shape = tuple(shape)
    zeros = (0,) * len(shape)
    index_map = lambda b: zeros
    if single_buffer:
        try:
            return pl.BlockSpec(shape, index_map, pipeline_mode=pl.Buffered(1))
        except Exception:
            pass
    return pl.BlockSpec(shape, index_map)


def _mosaic_params(per_step_byte_estimate):
    """Parallel 1-D grid + hardware-aware scoped-VMEM limit."""
    cap = _vmem_capacity_bytes()
    limit = int(min(max(int(per_step_byte_estimate) + (8 << 20), 32 << 20),
                    int(0.85 * cap)))
    return pltpu.CompilerParams(
        dimension_semantics=("parallel",),
        vmem_limit_bytes=limit,
    )


def _ffn_row_chunk(rows, d_ff, budget_bytes=8 << 20):
    """Row-chunk size so ~2 live [chunk, d_ff] fp32 intermediates fit the budget."""
    cap = max(8, (budget_bytes // max(1, 8 * d_ff)) // 8 * 8)
    return int(min(rows, cap))


def _encoder_step_bytes(bb, T, D, Ff, H, weight_bytes):
    """Generous per-grid-step VMEM estimate for the fused encoder layer."""
    rows = bb * T
    act = 4 * 14 * rows * D                               # x in/out (2x), q/k/v, ctx, ...
    head = 8 * bb * T * T + 16 * bb * T * max(1, D // H)  # one head's scores/probs/slices
    ffn = 8 * _ffn_row_chunk(rows, Ff) * Ff
    return int(weight_bytes + act + head + ffn)


def _pick_batch_block(B, T, D, Ff, H, weight_bytes, target_rows=256):
    """Batch rows per grid step: feed the MXU (Bb*T >= ~256) while staying inside a
    VMEM budget and keeping >= 2 grid steps so v7x's two TensorCores both work."""
    budget = int(0.70 * _vmem_capacity_bytes())
    want = max(1, min(B, pl.cdiv(target_rows, T)))
    if B >= 2:
        want = min(want, max(1, (B + 1) // 2))
    best = 1
    for cand in range(1, want + 1):
        if B % cand == 0 and _encoder_step_bytes(cand, T, D, Ff, H,
                                                 weight_bytes) <= budget:
            best = cand
    return best


# ---------------------------------------------------------------------------
# Kernel 1: fused RevIN (per-series instance norm over L) + inverted embedding.
#   enc[b, t, d] = sum_l tokens[b, t, l] * W_emb[l, d] + b_emb[d]
# tokens = concat(normalized variates, time-mark features) along T -- but the
# concat/transpose are never materialized: the L contraction is done directly
# on the [L, N] (variates) and [L, M] (marks) blocks.
# ---------------------------------------------------------------------------
def _make_embed_kernel(Bb, N, M):
    def kernel(x_ref, mark_ref, w_ref, b_ref, enc_ref, mu_ref, std_ref):
        w = w_ref[...]                                          # [L, D]
        bias = b_ref[...]                                       # [1, D]
        for b in range(Bb):
            xb = x_ref[b]                                       # [L, N]
            mu = jnp.mean(xb, axis=0, keepdims=True)            # [1, N]
            xc = xb - mu
            var = jnp.mean(xc * xc, axis=0, keepdims=True)      # unbiased=False
            std = jnp.sqrt(var + 1e-5)
            mu_ref[b] = mu
            std_ref[b] = std
            xn = xc / std                                       # [L, N]
            enc_ref[b, :N, :] = jax.lax.dot_general(
                xn, w, (((0,), (0,)), ((), ())),
                preferred_element_type=jnp.float32) + bias      # [N, D]
            enc_ref[b, N:, :] = jax.lax.dot_general(
                mark_ref[b], w, (((0,), (0,)), ((), ())),
                preferred_element_type=jnp.float32) + bias      # [M, D]

    return kernel


def embed_inverted(x_enc, x_mark, w_emb_t, b_emb, Bb, single_buffer):
    B, L, N = x_enc.shape
    M = x_mark.shape[2]
    T = N + M
    D = w_emb_t.shape[1]

    est = 4 * (2 * Bb * L * (N + M) + 2 * Bb * T * D
               + 2 * (L * D + D) + Bb * (3 * L * N + T * D + 8 * N))

    return pl.pallas_call(
        _make_embed_kernel(Bb, N, M),
        grid=(B // Bb,),
        in_specs=[
            pl.BlockSpec((Bb, L, N), lambda b: (b, 0, 0)),
            pl.BlockSpec((Bb, L, M), lambda b: (b, 0, 0)),
            _const_spec((L, D), single_buffer),
            _const_spec((1, D), single_buffer),
        ],
        out_specs=[
            pl.BlockSpec((Bb, T, D), lambda b: (b, 0, 0)),
            pl.BlockSpec((Bb, 1, N), lambda b: (b, 0, 0)),
            pl.BlockSpec((Bb, 1, N), lambda b: (b, 0, 0)),
        ],
        out_shape=[
            jax.ShapeDtypeStruct((B, T, D), jnp.float32),
            jax.ShapeDtypeStruct((B, 1, N), jnp.float32),
            jax.ShapeDtypeStruct((B, 1, N), jnp.float32),
        ],
        compiler_params=_mosaic_params(est),
    )(x_enc, x_mark, w_emb_t, b_emb.reshape(1, D))


# ---------------------------------------------------------------------------
# Kernel 2: fused iTransformer encoder layer, batch-blocked.
# ---------------------------------------------------------------------------
def _make_encoder_layer_kernel(Bb, T, n_heads, ffn_chunk):
    H = n_heads

    def kernel(x_ref, wq_ref, bq_ref, wk_ref, bk_ref, wv_ref, bv_ref,
               wo_ref, bo_ref, g1_ref, be1_ref, w1_ref, b1_ref,
               w2_ref, b2_ref, g2_ref, be2_ref, o_ref):
        D = x_ref.shape[-1]
        E = D // H
        rows = Bb * T

        x = x_ref[...].reshape(rows, D)                         # [Bb*T, D]

        # Full-width QKV projections: M = Bb*T rows feeds the MXU.
        # 1/sqrt(E) is pre-folded into wq / bq by the wrapper.
        q = jnp.dot(x, wq_ref[...], preferred_element_type=jnp.float32) + bq_ref[...]
        k = jnp.dot(x, wk_ref[...], preferred_element_type=jnp.float32) + bk_ref[...]
        v = jnp.dot(x, wv_ref[...], preferred_element_type=jnp.float32) + bv_ref[...]

        # Attention: static loop over heads so only one [Bb, T, T] score block is
        # live at a time (bounds VMEM for large T on v7x).
        # TODO(synk): add online-softmax query tiling for T so large that even a
        # single [Bb, T, T] score block overflows VMEM.
        ctx_cols = []
        for h in range(H):
            qh = q[:, h * E:(h + 1) * E].reshape(Bb, T, E)
            kh = k[:, h * E:(h + 1) * E].reshape(Bb, T, E)
            vh = v[:, h * E:(h + 1) * E].reshape(Bb, T, E)
            s = jnp.einsum('bqe,bke->bqk', qh, kh,
                           preferred_element_type=jnp.float32)   # [Bb, T, T]
            s = s - jnp.max(s, axis=-1, keepdims=True)
            p = jnp.exp(s)
            p = p / jnp.sum(p, axis=-1, keepdims=True)            # exact softmax
            ctx_cols.append(
                jnp.einsum('bqk,bke->bqe', p, vh,
                           preferred_element_type=jnp.float32).reshape(rows, E))

        # Reassemble heads along lanes once, then a single K=D output projection.
        ctx = ctx_cols[0] if H == 1 else jnp.concatenate(ctx_cols, axis=-1)
        attn = jnp.dot(ctx, wo_ref[...],
                       preferred_element_type=jnp.float32) + bo_ref[...]

        x1 = x + attn                                            # residual 1

        g1, be1 = g1_ref[...], be1_ref[...]
        g2, be2 = g2_ref[...], be2_ref[...]
        w1, b1 = w1_ref[...], b1_ref[...]
        w2, b2 = w2_ref[...], b2_ref[...]

        # LN1 -> FFN(gelu) -> residual -> LN2 in row chunks so the [chunk, d_ff]
        # gelu intermediate stays bounded (v7x's 64 MiB VMEM).
        pieces = []
        for r0 in range(0, rows, ffn_chunk):
            r1 = min(r0 + ffn_chunk, rows)
            xc = x1[r0:r1]
            mu1 = jnp.mean(xc, axis=-1, keepdims=True)
            var1 = jnp.mean((xc - mu1) ** 2, axis=-1, keepdims=True)
            xn = (xc - mu1) * jax.lax.rsqrt(var1 + 1e-5) * g1 + be1
            y = jnp.dot(xn, w1, preferred_element_type=jnp.float32) + b1
            y = jax.nn.gelu(y, approximate=False)                # exact F.gelu
            y = jnp.dot(y, w2, preferred_element_type=jnp.float32) + b2
            z = xn + y                                           # residual 2
            mu2 = jnp.mean(z, axis=-1, keepdims=True)
            var2 = jnp.mean((z - mu2) ** 2, axis=-1, keepdims=True)
            pieces.append((z - mu2) * jax.lax.rsqrt(var2 + 1e-5) * g2 + be2)

        out = pieces[0] if len(pieces) == 1 else jnp.concatenate(pieces, axis=0)
        o_ref[...] = out.reshape(Bb, T, D)

    return kernel


def encoder_layer(x, lp, n_heads, Bb, single_buffer):
    B, T, D = x.shape
    Ff = lp['w1_t'].shape[1]
    H = n_heads
    E = D // H
    scale = jnp.float32(1.0 / (E ** 0.5))
    rows = Bb * T
    ffn_chunk = _ffn_row_chunk(rows, Ff)

    weights = [
        lp['wq_t'] * scale, (lp['bq'] * scale).reshape(1, D),   # scale folded into Q
        lp['wk_t'], lp['bk'].reshape(1, D),
        lp['wv_t'], lp['bv'].reshape(1, D),
        lp['wo_t'], lp['bo'].reshape(1, D),
        lp['g1'].reshape(1, D), lp['be1'].reshape(1, D),
        lp['w1_t'], lp['b1'].reshape(1, Ff),
        lp['w2_t'], lp['b2'].reshape(1, D),
        lp['g2'].reshape(1, D), lp['be2'].reshape(1, D),
    ]
    in_specs = [pl.BlockSpec((Bb, T, D), lambda b: (b, 0, 0))]
    in_specs += [_const_spec(w.shape, single_buffer) for w in weights]

    weight_bytes = sum(int(w.size) * 4 for w in weights)
    if not single_buffer:
        weight_bytes *= 2                                        # double-buffered fallback
    est = _encoder_step_bytes(Bb, T, D, Ff, H, weight_bytes)

    # TODO(synk): for very large d_model/d_ff on v7x, store the GEMM weights in
    # bf16 (cast inside the kernel) to halve the resident weight footprint.
    return pl.pallas_call(
        _make_encoder_layer_kernel(Bb, T, H, ffn_chunk),
        grid=(B // Bb,),
        in_specs=in_specs,
        out_specs=pl.BlockSpec((Bb, T, D), lambda b: (b, 0, 0)),
        out_shape=jax.ShapeDtypeStruct((B, T, D), jnp.float32),
        compiler_params=_mosaic_params(est),
    )(x, *weights)


# ---------------------------------------------------------------------------
# Kernel 3: fused final LayerNorm + projection head + token->time transpose +
# de-normalization. Only the N real variate tokens are processed; the output is
# written directly in [B, pred_len, N] layout (no wrapper transpose).
# ---------------------------------------------------------------------------
def _make_head_kernel(Bb, n_real):
    def kernel(enc_ref, std_ref, mu_ref, g_ref, b_ref, wp_ref, bp_ref, o_ref):
        g = g_ref[...]
        beta = b_ref[...]
        wp = wp_ref[...]                                        # [P, D] (torch layout)
        bp = bp_ref[...]                                        # [P, 1]
        for b in range(Bb):
            x = enc_ref[b, :n_real, :]                          # [N, D]
            m = jnp.mean(x, axis=-1, keepdims=True)
            var = jnp.mean((x - m) ** 2, axis=-1, keepdims=True)
            xn = (x - m) * jax.lax.rsqrt(var + 1e-5) * g + beta
            # proj^T[p, n] = sum_d W_proj[p, d] * xn[n, d]
            proj_t = jax.lax.dot_general(
                wp, xn, (((1,), (1,)), ((), ())),
                preferred_element_type=jnp.float32)             # [P, N]
            o_ref[b] = (proj_t + bp) * std_ref[b] + mu_ref[b]

    return kernel


def projection_head(enc, stdev, means, g_norm, b_norm, w_proj, b_proj,
                    n_real, pred_len, Bb, single_buffer):
    B, T, D = enc.shape
    P = pred_len
    est = 4 * (2 * Bb * T * D + 2 * Bb * P * n_real
               + 2 * (P * D + P + 2 * D) + Bb * (P * n_real + 3 * n_real * D))

    # TODO(synk): pad N up to a multiple of 128 (and slice in the wrapper) for
    # lane-dense output stores when N is large and not 128-aligned.
    return pl.pallas_call(
        _make_head_kernel(Bb, n_real),
        grid=(B // Bb,),
        in_specs=[
            pl.BlockSpec((Bb, T, D), lambda b: (b, 0, 0)),
            pl.BlockSpec((Bb, 1, n_real), lambda b: (b, 0, 0)),
            pl.BlockSpec((Bb, 1, n_real), lambda b: (b, 0, 0)),
            _const_spec((1, D), single_buffer),
            _const_spec((1, D), single_buffer),
            _const_spec((P, D), single_buffer),
            _const_spec((P, 1), single_buffer),
        ],
        out_specs=pl.BlockSpec((Bb, P, n_real), lambda b: (b, 0, 0)),
        out_shape=jax.ShapeDtypeStruct((B, P, n_real), jnp.float32),
        compiler_params=_mosaic_params(est),
    )(enc, stdev, means, g_norm.reshape(1, D), b_norm.reshape(1, D),
      w_proj, b_proj.reshape(P, 1))


# ---------------------------------------------------------------------------
# Full forward pass (forecast branch of Model.forward).
# ---------------------------------------------------------------------------
def itransformer_forecast(params, x_enc, x_mark_enc, cfg):
    B, L, N = x_enc.shape
    M = x_mark_enc.shape[2]
    T = N + M
    D = cfg['d_model']
    Ff = cfg['d_ff']
    H = cfg['n_heads']

    single = _single_buffer_weights_supported()
    layer_weight_elems = 4 * D * D + 2 * D * Ff + 10 * D + Ff
    weight_bytes = 4 * layer_weight_elems * (1 if single else 2)
    Bb = _pick_batch_block(B, T, D, Ff, H, weight_bytes)

    # RevIN + inverted embedding (fused Pallas kernel).
    enc, means, stdev = embed_inverted(
        x_enc, x_mark_enc, params['w_emb_t'], params['b_emb'], Bb, single)

    # Encoder stack (fused Pallas layers).
    for lp in params['layers']:
        enc = encoder_layer(enc, lp, H, Bb, single)

    # Final LayerNorm + projection + transpose + de-norm (fused Pallas kernel).
    # forward()'s [:, -pred_len:, :] slice is an identity here.
    return projection_head(enc, stdev, means, params['g_norm'], params['b_norm'],
                           params['w_proj'], params['b_proj'],
                           N, cfg['pred_len'], Bb, single)


# ---------------------------------------------------------------------------
# Deterministic parameter initialization (shapes from Model.__init__).
# Encoder-layer / embedding weights are stored pre-transposed ([in, out]); the
# projection-head weight stays in torch layout ([pred_len, d_model]).
# ---------------------------------------------------------------------------
def init_params(key, cfg):
    L, D, Ff, P = cfg['seq_len'], cfg['d_model'], cfg['d_ff'], cfg['pred_len']
    ks = iter(jax.random.split(key, 8 + 12 * cfg['e_layers']))

    def w(shape, scale=0.05):
        return (scale * jax.random.normal(next(ks), shape)).astype(jnp.float32)

    params = {
        'w_emb_t': w((L, D)), 'b_emb': w((D,), 0.01),            # value_embedding
        'g_norm': jnp.ones((D,), jnp.float32),                   # encoder final LayerNorm
        'b_norm': jnp.zeros((D,), jnp.float32),
        'w_proj': w((P, D)), 'b_proj': w((P,), 0.01),            # projection head
        'layers': [],
    }
    for _ in range(cfg['e_layers']):
        params['layers'].append({
            'wq_t': w((D, D)), 'bq': w((D,), 0.01),
            'wk_t': w((D, D)), 'bk': w((D,), 0.01),
            'wv_t': w((D, D)), 'bv': w((D,), 0.01),
            'wo_t': w((D, D)), 'bo': w((D,), 0.01),
            'g1': jnp.ones((D,), jnp.float32), 'be1': jnp.zeros((D,), jnp.float32),
            'w1_t': w((D, Ff)), 'b1': w((Ff,), 0.01),            # conv1 (kernel_size=1)
            'w2_t': w((Ff, D)), 'b2': w((D,), 0.01),             # conv2 (kernel_size=1)
            'g2': jnp.ones((D,), jnp.float32), 'be2': jnp.zeros((D,), jnp.float32),
        })
    return params


if __name__ == "__main__":
    cfg = dict(task_name='long_term_forecast', seq_len=16, pred_len=8,
               d_model=32, n_heads=4, d_ff=32, e_layers=2)
    B, N, M = 2, 4, 4  # batch, variates (enc_in), time-mark features

    key = jax.random.PRNGKey(0)
    kx, km, kp = jax.random.split(key, 3)
    x_enc = jax.random.normal(kx, (B, cfg['seq_len'], N), dtype=jnp.float32)
    x_mark_enc = jax.random.normal(km, (B, cfg['seq_len'], M), dtype=jnp.float32)
    params = init_params(kp, cfg)

    out = itransformer_forecast(params, x_enc, x_mark_enc, cfg)
    out = jax.block_until_ready(out)
    assert out.shape == (B, cfg['pred_len'], N), out.shape
    assert bool(jnp.all(jnp.isfinite(out)))
    print("KERNEL_OK")
</pallas_src>

<mosaic_0001>
module attributes {stable_mosaic.version = 11 : i64} {
  func.func @_probe(%arg0: i32, %arg1: memref<8x128xf32, #tpu.memory_space<vmem>>, %arg2: memref<8x128xf32, #tpu.memory_space<vmem>>, %arg3: memref<8x128xf32, #tpu.memory_space<vmem>>) attributes {dimension_semantics = [#tpu.dimension_semantics<arbitrary>], iteration_bounds = array<i64: 2>, scalar_prefetch = 0 : i64, scratch_operands = 0 : i64, tpu.core_type = #tpu.core_type<tc>, window_params = [{pipeline_mode = #tpu.pipeline_mode<synchronous>, transform_indices = @transform_0, window_bounds = array<i64: 8, 128>}, {transform_indices = @transform_1, window_bounds = array<i64: 8, 128>}, {transform_indices = @transform_2, window_bounds = array<i64: 8, 128>}]} {
    %c0 = arith.constant 0 : index
    %c0_0 = arith.constant 0 : index
    %0 = vector.load %arg1[%c0, %c0_0] : memref<8x128xf32, #tpu.memory_space<vmem>>, vector<8x128xf32>
    %c0_1 = arith.constant 0 : index
    %c0_2 = arith.constant 0 : index
    %1 = vector.load %arg2[%c0_1, %c0_2] : memref<8x128xf32, #tpu.memory_space<vmem>>, vector<8x128xf32>
    %2 = arith.addf %0, %1 : vector<8x128xf32>
    %c0_3 = arith.constant 0 : index
    %c0_4 = arith.constant 0 : index
    %3 = vector.load %arg3[%c0_3, %c0_4] : memref<8x128xf32, #tpu.memory_space<vmem>>, vector<8x128xf32>
    tpu.vector_store %arg3[%c0_3, %c0_4], %2 {strides = array<i32>} : memref<8x128xf32, #tpu.memory_space<vmem>>, vector<8x128xf32>,
    return
  }
  func.func @transform_0(%arg0: i32) -> (i32, i32) {
    %c0_i32 = arith.constant 0 : i32
    %c0_i32_0 = arith.constant 0 : i32
    %c0_i32_1 = arith.constant 0 : i32
    return %c0_i32, %c0_i32_0 : i32, i32
  }
  func.func @transform_1(%arg0: i32) -> (i32, i32) {
    %c0_i32 = arith.constant 0 : i32
    %c0_i32_0 = arith.constant 0 : i32
    return %arg0, %c0_i32 : i32, i32
  }
  func.func @transform_2(%arg0: i32) -> (i32, i32) {
    %c0_i32 = arith.constant 0 : i32
    %c0_i32_0 = arith.constant 0 : i32
    return %arg0, %c0_i32 : i32, i32
  }
}

module attributes {stable_mosaic.version = 11 : i64} {
  func.func @kernel(%arg0: i32, %arg1: memref<1x16x4xf32, #tpu.memory_space<vmem>>, %arg2: memref<1x16x4xf32, #tpu.memory_space<vmem>>, %arg3: memref<16x32xf32, #tpu.memory_space<vmem>>, %arg4: memref<1x32xf32, #tpu.memory_space<vmem>>, %arg5: memref<1x8x32xf32, #tpu.memory_space<vmem>>, %arg6: memref<1x1x4xf32, #tpu.memory_space<vmem>>, %arg7: memref<1x1x4xf32, #tpu.memory_space<vmem>>) attributes {dimension_semantics = [#tpu.dimension_semantics<parallel>], iteration_bounds = array<i64: 2>, scalar_prefetch = 0 : i64, scratch_operands = 0 : i64, tpu.core_type = #tpu.core_type<tc>, window_params = [{transform_indices = @transform_0, window_bounds = array<i64: 1, 16, 4>}, {transform_indices = @transform_1, window_bounds = array<i64: 1, 16, 4>}, {pipeline_mode = #tpu.pipeline_mode<synchronous>, transform_indices = @transform_2, window_bounds = array<i64: 16, 32>}, {pipeline_mode = #tpu.pipeline_mode<synchronous>, transform_indices = @transform_3, window_bounds = array<i64: 1, 32>}, {transform_indices = @transform_4, window_bounds = array<i64: 1, 8, 32>}, {transform_indices = @transform_5, window_bounds = array<i64: 1, 1, 4>}, {transform_indices = @transform_6, window_bounds = array<i64: 1, 1, 4>}]} {
    %c0 = arith.constant 0 : index
    %c0_0 = arith.constant 0 : index
    %0 = vector.load %arg3[%c0, %c0_0] : memref<16x32xf32, #tpu.memory_space<vmem>>, vector<16x32xf32>
    %c0_1 = arith.constant 0 : index
    %c0_2 = arith.constant 0 : index
    %1 = vector.load %arg4[%c0_1, %c0_2] : memref<1x32xf32, #tpu.memory_space<vmem>>, vector<1x32xf32>
    %c0_3 = arith.constant 0 : index
    %c0_4 = arith.constant 0 : index
    %c0_5 = arith.constant 0 : index
    %2 = vector.load %arg1[%c0_3, %c0_4, %c0_5] : memref<1x16x4xf32, #tpu.memory_space<vmem>>, vector<1x16x4xf32>
    %3 = vector.shape_cast %2 : vector<1x16x4xf32> to vector<16x4xf32>
    %cst = arith.constant dense<0.000000e+00> : vector<4xf32>
    %4 = vector.multi_reduction <add>, %3, %cst [0] : vector<16x4xf32> to vector<4xf32>
    %5 = vector.shape_cast %4 : vector<4xf32> to vector<1x4xf32>
    %cst_6 = arith.constant 1.600000e+01 : f32
    %6 = vector.broadcast %cst_6 : f32 to vector<1x4xf32>
    %7 = arith.divf %5, %6 : vector<1x4xf32>
    %8 = vector.broadcast %7 : vector<1x4xf32> to vector<16x4xf32>
    %9 = arith.subf %3, %8 : vector<16x4xf32>
    %10 = arith.mulf %9, %9 : vector<16x4xf32>
    %cst_7 = arith.constant dense<0.000000e+00> : vector<4xf32>
    %11 = vector.multi_reduction <add>, %10, %cst_7 [0] : vector<16x4xf32> to vector<4xf32>
    %12 = vector.shape_cast %11 : vector<4xf32> to vector<1x4xf32>
    %cst_8 = arith.constant 1.600000e+01 : f32
    %13 = vector.broadcast %cst_8 : f32 to vector<1x4xf32>
    %14 = arith.divf %12, %13 : vector<1x4xf32>
    %cst_9 = arith.constant 9.99999974E-6 : f32
    %15 = vector.broadcast %cst_9 : f32 to vector<1x4xf32>
    %16 = arith.addf %14, %15 : vector<1x4xf32>
    %17 = math.sqrt %16 : vector<1x4xf32>
    %c0_10 = arith.constant 0 : index
    %c0_11 = arith.constant 0 : index
    %c0_12 = arith.constant 0 : index
    %18 = vector.load %arg6[%c0_10, %c0_11, %c0_12] : memref<1x1x4xf32, #tpu.memory_space<vmem>>, vector<1x1x4xf32>
    %19 = vector.shape_cast %18 : vector<1x1x4xf32> to vector<1x4xf32>
    %20 = vector.shape_cast %7 : vector<1x4xf32> to vector<1x1x4xf32>
    tpu.vector_store %arg6[%c0_10, %c0_11, %c0_12], %20 {strides = array<i32>} : memref<1x1x4xf32, #tpu.memory_space<vmem>>, vector<1x1x4xf32>,
    %c0_13 = arith.constant 0 : index
    %c0_14 = arith.constant 0 : index
    %c0_15 = arith.constant 0 : index
    %21 = vector.load %arg7[%c0_13, %c0_14, %c0_15] : memref<1x1x4xf32, #tpu.memory_space<vmem>>, vector<1x1x4xf32>
    %22 = vector.shape_cast %21 : vector<1x1x4xf32> to vector<1x4xf32>
    %23 = vector.shape_cast %17 : vector<1x4xf32> to vector<1x1x4xf32>
    tpu.vector_store %arg7[%c0_13, %c0_14, %c0_15], %23 {strides = array<i32>} : memref<1x1x4xf32, #tpu.memory_space<vmem>>, vector<1x1x4xf32>,
    %24 = vector.broadcast %17 : vector<1x4xf32> to vector<16x4xf32>
    %25 = arith.divf %9, %24 : vector<16x4xf32>
    %cst_16 = arith.constant dense<0.000000e+00> : vector<4x32xf32>
    %26 = tpu.matmul %25, %0, %cst_16 {dimension_numbers = #tpu.dot_dimension_numbers<[0], [0], [1], [1], [0, 1, 1, 1], [], []>} : vector<16x4xf32>, vector<16x32xf32>, vector<4x32xf32> -> vector<4x32xf32>
    %27 = vector.broadcast %1 : vector<1x32xf32> to vector<4x32xf32>
    %28 = arith.addf %26, %27 : vector<4x32xf32>
    %c0_17 = arith.constant 0 : index
    %c0_18 = arith.constant 0 : index
    %c0_19 = arith.constant 0 : index
    %29 = vector.load %arg5[%c0_17, %c0_18, %c0_19] : memref<1x8x32xf32, #tpu.memory_space<vmem>>, vector<1x4x32xf32>
    %30 = vector.shape_cast %29 : vector<1x4x32xf32> to vector<4x32xf32>
    %31 = vector.shape_cast %28 : vector<4x32xf32> to vector<1x4x32xf32>
    tpu.vector_store %arg5[%c0_17, %c0_18, %c0_19], %31 {strides = array<i32>} : memref<1x8x32xf32, #tpu.memory_space<vmem>>, vector<1x4x32xf32>,
    %c0_20 = arith.constant 0 : index
    %c0_21 = arith.constant 0 : index
    %c0_22 = arith.constant 0 : index
    %32 = vector.load %arg2[%c0_20, %c0_21, %c0_22] : memref<1x16x4xf32, #tpu.memory_space<vmem>>, vector<1x16x4xf32>
    %33 = vector.shape_cast %32 : vector<1x16x4xf32> to vector<16x4xf32>
    %cst_23 = arith.constant dense<0.000000e+00> : vector<4x32xf32>
    %34 = tpu.matmul %33, %0, %cst_23 {dimension_numbers = #tpu.dot_dimension_numbers<[0], [0], [1], [1], [0, 1, 1, 1], [], []>} : vector<16x4xf32>, vector<16x32xf32>, vector<4x32xf32> -> vector<4x32xf32>
    %35 = vector.broadcast %1 : vector<1x32xf32> to vector<4x32xf32>
    %36 = arith.addf %34, %35 : vector<4x32xf32>
    %c0_24 = arith.constant 0 : index
    %c4 = arith.constant 4 : index
    %c0_25 = arith.constant 0 : index
    %37 = vector.load %arg5[%c0_24, %c4, %c0_25] : memref<1x8x32xf32, #tpu.memory_space<vmem>>, vector<1x4x32xf32>
    %38 = vector.shape_cast %37 : vector<1x4x32xf32> to vector<4x32xf32>
    %39 = vector.shape_cast %36 : vector<4x32xf32> to vector<1x4x32xf32>
    tpu.vector_store %arg5[%c0_24, %c4, %c0_25], %39 {strides = array<i32>} : memref<1x8x32xf32, #tpu.memory_space<vmem>>, vector<1x4x32xf32>,
    return
  }
  func.func @transform_0(%arg0: i32) -> (i32, i32, i32) {
    %c0_i32 = arith.constant 0 : i32
    %c0_i32_0 = arith.constant 0 : i32
    %c0_i32_1 = arith.constant 0 : i32
    return %arg0, %c0_i32, %c0_i32_0 : i32, i32, i32
  }
  func.func @transform_1(%arg0: i32) -> (i32, i32, i32) {
    %c0_i32 = arith.constant 0 : i32
    %c0_i32_0 = arith.constant 0 : i32
    %c0_i32_1 = arith.constant 0 : i32
    return %arg0, %c0_i32, %c0_i32_0 : i32, i32, i32
  }
  func.func @transform_2(%arg0: i32) -> (i32, i32) {
    %c0_i32 = arith.constant 0 : i32
    %c0_i32_0 = arith.constant 0 : i32
    %c0_i32_1 = arith.constant 0 : i32
    return %c0_i32, %c0_i32_0 : i32, i32
  }
  func.func @transform_3(%arg0: i32) -> (i32, i32) {
    %c0_i32 = arith.constant 0 : i32
    %c0_i32_0 = arith.constant 0 : i32
    %c0_i32_1 = arith.constant 0 : i32
    return %c0_i32, %c0_i32_0 : i32, i32
  }
  func.func @transform_4(%arg0: i32) -> (i32, i32, i32) {
    %c0_i32 = arith.constant 0 : i32
    %c0_i32_0 = arith.constant 0 : i32
    %c0_i32_1 = arith.constant 0 : i32
    return %arg0, %c0_i32, %c0_i32_0 : i32, i32, i32
  }
  func.func @transform_5(%arg0: i32) -> (i32, i32, i32) {
    %c0_i32 = arith.constant 0 : i32
    %c0_i32_0 = arith.constant 0 : i32
    %c0_i32_1 = arith.constant 0 : i32
    return %arg0, %c0_i32, %c0_i32_0 : i32, i32, i32
  }
  func.func @transform_6(%arg0: i32) -> (i32, i32, i32) {
    %c0_i32 = arith.constant 0 : i32
    %c0_i32_0 = arith.constant 0 : i32
    %c0_i32_1 = arith.constant 0 : i32
    return %arg0, %c0_i32, %c0_i32_0 : i32, i32, i32
  }
}

</mosaic_0001>

<llo_original>
// kernel: tpu_custom_call.1
$region0: #{tpu_custom_call.1}
  #allocation0 [shape = 'u32[]', space=smem, size = 0x4, offset = 0x4, fixed_abs, tag = 'smem constant byte address 0x4 - core index']
  #allocation1 [shape = 'u32[144,128]{1,0:T(1,128)}', space=vmem, size = 0x12000, scoped, tag = 'internal scratch']
  %s0 = inlined_call_operand.hbm [shape: f32[8,128], index: 0, kind: input, shape index: {}]
  %s1 = inlined_call_operand.hbm [shape: f32[16,128], index: 1, kind: input, shape index: {}]
  %s2 = inlined_call_operand.hbm [shape: f32[16,128], index: 2, kind: output, shape index: {}]
  %s3 = sld [smem:[#allocation0]]
  $region49: #{tpu_custom_call.1} parent=0
    _
  %s5 = ssub.s32 1, %s3
  %s6 = scalar_select 0, %s5, %s3
  $region1: #{tpu_custom_call.1} parent=0
    #allocation2 [shape = 'u8[4096]{0}', space=vmem, size = 0x1000, scoped, tag = 'input window, operand 0, single buffered']
    #allocation3 [shape = 's32[2]{0}', space=sflag, size = 0x8, scoped, tag = 'scoped memory for tpu_custom_call.1']
    #allocation4 [shape = 's32[2]{0}', space=sflag, size = 0x8, scoped, tag = 'scoped memory for tpu_custom_call.1']
    #allocation5 [shape = 'u8[8192]{0}', space=vmem, size = 0x2000, scoped, tag = 'input window, operand 1']
    #allocation6 [shape = 's32[2]{0}', space=sflag, size = 0x8, scoped, tag = 'scoped memory for tpu_custom_call.1']
    #allocation7 [shape = 'u8[8192]{0}', space=vmem, size = 0x2000, scoped, tag = 'output window, operand 0']
    %7 = vsyncpa [#allocation3], 0
    %8 = vsyncpa [#allocation6], 0
    %s9 = scalar_lea.sflag [#allocation6], 1
    %10 = vsyncpa %s9, 0
    %11 = vsyncpa [#allocation4], 0
    %s12 = scalar_lea.sflag [#allocation4], 1
    %13 = vsyncpa %s12, 0
    loop: start=0, step=1, limit=4
    $region2: #{tpu_custom_call.1} parent=1 // loop_pre_header
      _
    $region3: #{tpu_custom_call.1} parent=1 // loop_header
      %s15 = sphi 0, %s19
      %p16 = scmp.ge.s32.totalorder %s15, 4
      %s23 = sphi 0, %s23
      %s25 = sphi 0, %s23
      %s26 = sphi 0, %s25
      %s40 = sphi 0, %s26
      %s46 = sphi 0, %s48
      %s49 = sphi 0, %s46
      %s50 = sphi 0, %s49
      %s66 = sphi 0, %s50
      %s72 = sphi 0, %s74
      %s75 = sphi 0, %s72
      %s76 = sphi 0, %s75
      %s92 = sphi 0, %s76
    $region4: #{tpu_custom_call.1} parent=1 // loop_header_branch
      %18 = sbr.rel (%p16) target = $region8
    $region5: #{tpu_custom_call.1} parent=1 // loop_body
      %s20 = ssub.s32 %s15, 1
      %s21 = ssub.s32 %s15, 2
      %s22 = sadd.s32 %s15, 1
      %s24 = sadd.s32 %s23, 1
      %p27 = scmp.eq.s32.totalorder %s15, 1
      %p28 = scmp.ne.s32.totalorder %s23, %s25
      %p29 = scmp.eq.s32.totalorder %s15, 0
      %p30 = por %p28, %p29
      %p31 = scmp.ne.s32.totalorder %s23, %s25
      %p32 = scmp.eq.s32.totalorder %s20, 1
      %p33 = por %p31, %p32
      %p34 = scmp.ne.s32.totalorder %s25, %s26
      %p35 = scmp.eq.s32.totalorder %s20, 0
      %p36 = por %p34, %p35
      %p37 = scmp.ne.s32.totalorder %s25, %s26
      %p38 = scmp.eq.s32.totalorder %s21, 1
      %p39 = por %p37, %p38
      %p41 = scmp.ne.s32.totalorder %s26, %s40
      %p42 = scmp.eq.s32.totalorder %s21, 0
      %p43 = por %p41, %p42
      %s44 = ssub.s32 %s15, %s22
      %p45 = scmp.eq.s32.totalorder %s44, 0
      %s47 = sadd.s32 %s46, 1
      %s48 = scalar_select %p45, %s46, %s47
      %p51 = pneg %p45
      %p52 = scmp.eq.s32.totalorder %s15, 1
      %p53 = por %p51, %p52
      %p54 = scmp.ne.s32.totalorder %s46, %s49
      %p55 = scmp.eq.s32.totalorder %s15, 0
      %p56 = por %p54, %p55
      %p57 = scmp.ne.s32.totalorder %s46, %s49
      %p58 = scmp.eq.s32.totalorder %s20, 1
      %p59 = por %p57, %p58
      %p60 = scmp.ne.s32.totalorder %s49, %s50
      %p61 = scmp.eq.s32.totalorder %s20, 0
      %p62 = por %p60, %p61
      %p63 = scmp.ne.s32.totalorder %s49, %s50
      %p64 = scmp.eq.s32.totalorder %s21, 1
      %p65 = por %p63, %p64
      %p67 = scmp.ne.s32.totalorder %s50, %s66
      %p68 = scmp.eq.s32.totalorder %s21, 0
      %p69 = por %p67, %p68
      %s70 = ssub.s32 %s15, %s22
      %p71 = scmp.eq.s32.totalorder %s70, 0
      %s73 = sadd.s32 %s72, 1
      %s74 = scalar_select %p71, %s72, %s73
      %p77 = pneg %p71
      %p78 = scmp.eq.s32.totalorder %s15, 1
      %p79 = por %p77, %p78
      %p80 = scmp.ne.s32.totalorder %s72, %s75
      %p81 = scmp.eq.s32.totalorder %s15, 0
      %p82 = por %p80, %p81
      %p83 = scmp.ne.s32.totalorder %s72, %s75
      %p84 = scmp.eq.s32.totalorder %s20, 1
      %p85 = por %p83, %p84
      %p86 = scmp.ne.s32.totalorder %s75, %s76
      %p87 = scmp.eq.s32.totalorder %s20, 0
      %p88 = por %p86, %p87
      %p89 = scmp.ne.s32.totalorder %s75, %s76
      %p90 = scmp.eq.s32.totalorder %s21, 1
      %p91 = por %p89, %p90
      %p93 = scmp.ne.s32.totalorder %s76, %s92
      %p94 = scmp.eq.s32.totalorder %s21, 0
      %p95 = por %p93, %p94
      %p96 = scmp.le.s32.totalorder 1, %s15
      %p97 = scmp.lt.s32.totalorder %s15, 3
      %p98 = pnand %p96, %p97
      %p99 = pneg %p98
      // Predicated region
      $region9: #{tpu_custom_call.1} parent=5 // pred_check
        _
      $region10: #{tpu_custom_call.1} parent=5 // pred_check_branch
        %101 = sbr.rel (%p98) target = $region12
      $region11: #{tpu_custom_call.1} parent=5 // pred_region
        %s102 = ssub.s32 %s15, 1
        // Predicated region
        $region13: #{tpu_custom_call.1} parent=11 // pred_check
          %p103 = pneg %p36
        $region14: #{tpu_custom_call.1} parent=11 // pred_check_branch
          %105 = sbr.rel (%p103) target = $region16
        $region15: #{tpu_custom_call.1} parent=11 // pred_region
          %s107 = ssub.s32 128, 128
          %108 = vsyncadd [#allocation3], %s107
          %s110 = sshll.u32 [#allocation2], 4
          %s111 = int_to_ptr.vmem [resolvable:$true] %s110
          %113 = dma.hbm_to_vmem [thread:$0]  %s0, 128, %s111, [#allocation3]
        $region16: #{tpu_custom_call.1} parent=11 // pred_fallthru
          _
      $region12: #{tpu_custom_call.1} parent=5 // pred_fallthru
        _
      %p114 = scmp.lt.s32.totalorder %s15, 2
      // Predicated region
      $region17: #{tpu_custom_call.1} parent=5 // pred_check
        %p115 = pneg %p114
      $region18: #{tpu_custom_call.1} parent=5 // pred_check_branch
        %117 = sbr.rel (%p115) target = $region20
      $region19: #{tpu_custom_call.1} parent=5 // pred_region
        // Predicated region
        $region21: #{tpu_custom_call.1} parent=19 // pred_check
          %p118 = pneg %p56
        $region22: #{tpu_custom_call.1} parent=19 // pred_check_branch
          %120 = sbr.rel (%p118) target = $region24
        $region23: #{tpu_custom_call.1} parent=19 // pred_region
          %s121 = sand.u32 %s46, 1
          %s122 = scalar_lea.sflag [#allocation6], %s121
          %s123 = sand.u32 %s46, 1
          %s124 = smul.addr %s123, 8
          %s125 = scalar_lea.vmem [#allocation5], %s124
          %s127 = ssub.s32 128, 128
          %128 = vsyncadd %s122, %s127
          %s129 = smul.addr %s15, 128
          %s130 = scalar_lea.hbm %s1, %s129
          %s132 = sshll.u32 %s125, 4
          %s133 = int_to_ptr.vmem [resolvable:$true] %s132
          %135 = dma.hbm_to_vmem [thread:$0]  %s130, 128, %s133, %s122
        $region24: #{tpu_custom_call.1} parent=19 // pred_fallthru
          _
      $region20: #{tpu_custom_call.1} parent=5 // pred_fallthru
        _
      %p136 = scmp.le.s32.totalorder 1, %s15
      %p137 = scmp.lt.s32.totalorder %s15, 3
      %p138 = pnand %p136, %p137
      %p139 = pneg %p138
      // Predicated region
      $region25: #{tpu_custom_call.1} parent=5 // pred_check
        _
      $region26: #{tpu_custom_call.1} parent=5 // pred_check_branch
        %141 = sbr.rel (%p138) target = $region28
      $region27: #{tpu_custom_call.1} parent=5 // pred_region
        %s142 = ssub.s32 %s15, 1
        // Predicated region
        $region29: #{tpu_custom_call.1} parent=27 // pred_check
          %p143 = pneg %p36
        $region30: #{tpu_custom_call.1} parent=27 // pred_check_branch
          %145 = sbr.rel (%p143) target = $region32
        $region31: #{tpu_custom_call.1} parent=27 // pred_region
          %146 = dma.done [#allocation3], 128
        $region32: #{tpu_custom_call.1} parent=27 // pred_fallthru
          _
        %s147 = sand.u32 %s49, 1
        %s148 = scalar_lea.sflag [#allocation6], %s147
        %s149 = sand.u32 %s49, 1
        %s150 = smul.addr %s149, 8
        %s151 = scalar_lea.vmem [#allocation5], %s150
        // Predicated region
        $region33: #{tpu_custom_call.1} parent=27 // pred_check
          %p152 = pneg %p62
        $region34: #{tpu_custom_call.1} parent=27 // pred_check_branch
          %154 = sbr.rel (%p152) target = $region36
        $region35: #{tpu_custom_call.1} parent=27 // pred_region
          %155 = dma.done %s148, 128
        $region36: #{tpu_custom_call.1} parent=27 // pred_fallthru
          _
        %p156 = pneg %p36
        %p157 = pneg %p33
        %s158 = sand.u32 %s49, 1
        %s159 = scalar_lea.sflag [#allocation6], %s158
        %s160 = sand.u32 %s49, 1
        %s161 = smul.addr %s160, 8
        %s162 = scalar_lea.vmem [#allocation5], %s161
        %p163 = pneg %p62
        %p164 = pneg %p59
        %p165 = pneg %p88
        %p166 = pneg %p85
        %s167 = sand.u32 %s75, 1
        %s168 = scalar_lea.sflag [#allocation4], %s167
        %s169 = sand.u32 %s75, 1
        %s170 = smul.addr %s169, 8
        %s171 = scalar_lea.vmem [#allocation7], %s170
        %v172 = vld [vmem:[#allocation2] sm:$0xff]
        %v173 = vld [vmem:[%s151] sm:$0xff]
        %v174 = vadd.f32 %v172, %v173
        %175 = vst [vmem:[%s171] sm:$0xff] %v174
        %s176 = sand.u32 %s75, 1
        %s177 = scalar_lea.sflag [#allocation4], %s176
        %s178 = sand.u32 %s75, 1
        %s179 = smul.addr %s178, 8
        %s180 = scalar_lea.vmem [#allocation7], %s179
        // Predicated region
        $region37: #{tpu_custom_call.1} parent=27 // pred_check
          %p181 = pneg %p85
        $region38: #{tpu_custom_call.1} parent=27 // pred_check_branch
          %183 = sbr.rel (%p181) target = $region40
        $region39: #{tpu_custom_call.1} parent=27 // pred_region
          %s185 = ssub.s32 128, 128
          %186 = vsyncadd %s177, %s185
          %s187 = smul.addr %s20, 128
          %s188 = scalar_lea.hbm %s2, %s187
          %s190 = sshll.u32 %s180, 4
          %s191 = int_to_ptr.vmem [resolvable:$true] %s190
          %193 = dma.vmem_to_hbm [thread:$0]  %s191, 128, %s188, %s177
        $region40: #{tpu_custom_call.1} parent=27 // pred_fallthru
          _
      $region28: #{tpu_custom_call.1} parent=5 // pred_fallthru
        _
      %p194 = scmp.le.s32.totalorder 2, %s15
      // Predicated region
      $region41: #{tpu_custom_call.1} parent=5 // pred_check
        %p195 = pneg %p194
      $region42: #{tpu_custom_call.1} parent=5 // pred_check_branch
        %197 = sbr.rel (%p195) target = $region44
      $region43: #{tpu_custom_call.1} parent=5 // pred_region
        %s198 = ssub.s32 %s15, 2
        // Predicated region
        $region45: #{tpu_custom_call.1} parent=43 // pred_check
          %p199 = pneg %p91
        $region46: #{tpu_custom_call.1} parent=43 // pred_check_branch
          %201 = sbr.rel (%p199) target = $region48
        $region47: #{tpu_custom_call.1} parent=43 // pred_region
          %s202 = sand.u32 %s76, 1
          %s203 = scalar_lea.sflag [#allocation4], %s202
          %s204 = sand.u32 %s76, 1
          %s205 = smul.addr %s204, 8
          %s206 = scalar_lea.vmem [#allocation7], %s205
          %207 = dma.done %s203, 128
        $region48: #{tpu_custom_call.1} parent=43 // pred_fallthru
          _
      $region44: #{tpu_custom_call.1} parent=5 // pred_fallthru
        _
    $region6: #{tpu_custom_call.1} parent=1 // loop_footer
      %s19 = sadd.s32 1, %s15
    $region7: #{tpu_custom_call.1} parent=1 // loop_footer_branch
      %14 = sbr.rel target = $region3
    $region8: #{tpu_custom_call.1} parent=1 // loop_exit
      _
    %208 = vsyncpa [#allocation3], 1
    %s209 = scalar_lea.sflag [#allocation3], 1
    %210 = vsyncpa %s209, 1
    %211 = vsyncpa [#allocation6], 1
    %s212 = scalar_lea.sflag [#allocation6], 1
    %213 = vsyncpa %s212, 1
    %214 = vsyncpa [#allocation4], 1
    %s215 = scalar_lea.sflag [#allocation4], 1
    %216 = vsyncpa %s215, 1

// kernel: tpu_custom_call.1
$region0: #{tpu_custom_call.1}
  #allocation0 [shape = 'u32[]', space=smem, size = 0x4, offset = 0x4, fixed_abs, tag = 'smem constant byte address 0x4 - core index']
  #allocation1 [shape = 'u32[144,128]{1,0:T(1,128)}', space=vmem, size = 0x12000, scoped, tag = 'internal scratch']
  %s0 = inlined_call_operand.vmem [shape: f32[2,16,4], index: 0, kind: input, shape index: {}]
  %s1 = inlined_call_operand.vmem [shape: f32[2,16,4], index: 1, kind: input, shape index: {}]
  %s2 = inlined_call_operand.vmem [shape: f32[16,32], index: 2, kind: input, shape index: {}]
  %s3 = inlined_call_operand.vmem [shape: f32[1,32], index: 3, kind: input, shape index: {}]
  %s4 = inlined_call_operand.hbm [shape: f32[2,8,32], index: 4, kind: output, shape index: {0}]
  %s5 = inlined_call_operand.hbm [shape: f32[2,1,4], index: 5, kind: output, shape index: {1}]
  %s6 = inlined_call_operand.hbm [shape: f32[2,1,4], index: 6, kind: output, shape index: {2}]
  %7 = xla_tuple %s4, %s5, %s6
  %s8 = sld [smem:[#allocation0]]
  $region65: #{tpu_custom_call.1} parent=0
    _
  %s10 = ssub.s32 1, %s8
  %s11 = scalar_select 0, %s10, %s8
  $region1: #{tpu_custom_call.1} parent=0
    #allocation2 [shape = 'u8[8192]{0}', space=vmem, size = 0x2000, scoped, tag = 'output window, operand 0']
    #allocation3 [shape = 's32[2]{0}', space=sflag, size = 0x8, scoped, tag = 'scoped memory for tpu_custom_call.1']
    #allocation4 [shape = 'u8[1024]{0}', space=vmem, size = 0x400, scoped, tag = 'output window, operand 1']
    #allocation5 [shape = 's32[2]{0}', space=sflag, size = 0x8, scoped, tag = 'scoped memory for tpu_custom_call.1']
    #allocation6 [shape = 'u8[1024]{0}', space=vmem, size = 0x400, scoped, tag = 'output window, operand 2']
    %12 = vsyncpa [#allocation3], 0
    %s13 = scalar_lea.sflag [#allocation3], 1
    %14 = vsyncpa %s13, 0
    %15 = vsyncpa [#allocation5], 0
    %s16 = scalar_lea.sflag [#allocation5], 1
    %17 = vsyncpa %s16, 0
    loop: start=0, step=1, limit=4
    $region2: #{tpu_custom_call.1} parent=1 // loop_pre_header
      _
    $region3: #{tpu_custom_call.1} parent=1 // loop_header
      %s19 = sphi 0, %s23
      %p20 = scmp.ge.s32.totalorder %s19, 4
      %s29 = sphi 0, %s31
      %s32 = sphi 0, %s29
      %s33 = sphi 0, %s32
      %s49 = sphi 0, %s33
      %s55 = sphi 0, %s57
      %s58 = sphi 0, %s55
      %s59 = sphi 0, %s58
      %s75 = sphi 0, %s59
      %s79 = sphi 0, %s79
      %s81 = sphi 0, %s79
      %s82 = sphi 0, %s81
      %s96 = sphi 0, %s82
      %s100 = sphi 0, %s100
      %s102 = sphi 0, %s100
      %s103 = sphi 0, %s102
      %s117 = sphi 0, %s103
      %s123 = sphi 0, %s125
      %s126 = sphi 0, %s123
      %s127 = sphi 0, %s126
      %s143 = sphi 0, %s127
      %s149 = sphi 0, %s151
      %s152 = sphi 0, %s149
      %s153 = sphi 0, %s152
      %s169 = sphi 0, %s153
      %s175 = sphi 0, %s177
      %s178 = sphi 0, %s175
      %s179 = sphi 0, %s178
      %s195 = sphi 0, %s179
    $region4: #{tpu_custom_call.1} parent=1 // loop_header_branch
      %22 = sbr.rel (%p20) target = $region8
    $region5: #{tpu_custom_call.1} parent=1 // loop_body
      %s24 = ssub.s32 %s19, 1
      %s25 = ssub.s32 %s19, 2
      %s26 = sadd.s32 %s19, 1
      %s27 = ssub.s32 %s19, %s26
      %p28 = scmp.eq.s32.totalorder %s27, 0
      %s30 = sadd.s32 %s29, 1
      %s31 = scalar_select %p28, %s29, %s30
      %p34 = pneg %p28
      %p35 = scmp.eq.s32.totalorder %s19, 1
      %p36 = por %p34, %p35
      %p37 = scmp.ne.s32.totalorder %s29, %s32
      %p38 = scmp.eq.s32.totalorder %s19, 0
      %p39 = por %p37, %p38
      %p40 = scmp.ne.s32.totalorder %s29, %s32
      %p41 = scmp.eq.s32.totalorder %s24, 1
      %p42 = por %p40, %p41
      %p43 = scmp.ne.s32.totalorder %s32, %s33
      %p44 = scmp.eq.s32.totalorder %s24, 0
      %p45 = por %p43, %p44
      %p46 = scmp.ne.s32.totalorder %s32, %s33
      %p47 = scmp.eq.s32.totalorder %s25, 1
      %p48 = por %p46, %p47
      %p50 = scmp.ne.s32.totalorder %s33, %s49
      %p51 = scmp.eq.s32.totalorder %s25, 0
      %p52 = por %p50, %p51
      %s53 = ssub.s32 %s19, %s26
      %p54 = scmp.eq.s32.totalorder %s53, 0
      %s56 = sadd.s32 %s55, 1
      %s57 = scalar_select %p54, %s55, %s56
      %p60 = pneg %p54
      %p61 = scmp.eq.s32.totalorder %s19, 1
      %p62 = por %p60, %p61
      %p63 = scmp.ne.s32.totalorder %s55, %s58
      %p64 = scmp.eq.s32.totalorder %s19, 0
      %p65 = por %p63, %p64
      %p66 = scmp.ne.s32.totalorder %s55, %s58
      %p67 = scmp.eq.s32.totalorder %s24, 1
      %p68 = por %p66, %p67
      %p69 = scmp.ne.s32.totalorder %s58, %s59
      %p70 = scmp.eq.s32.totalorder %s24, 0
      %p71 = por %p69, %p70
      %p72 = scmp.ne.s32.totalorder %s58, %s59
      %p73 = scmp.eq.s32.totalorder %s25, 1
      %p74 = por %p72, %p73
      %p76 = scmp.ne.s32.totalorder %s59, %s75
      %p77 = scmp.eq.s32.totalorder %s25, 0
      %p78 = por %p76, %p77
      %s80 = sadd.s32 %s79, 1
      %p83 = scmp.eq.s32.totalorder %s19, 1
      %p84 = scmp.ne.s32.totalorder %s79, %s81
      %p85 = scmp.eq.s32.totalorder %s19, 0
      %p86 = por %p84, %p85
      %p87 = scmp.ne.s32.totalorder %s79, %s81
      %p88 = scmp.eq.s32.totalorder %s24, 1
      %p89 = por %p87, %p88
      %p90 = scmp.ne.s32.totalorder %s81, %s82
      %p91 = scmp.eq.s32.totalorder %s24, 0
      %p92 = por %p90, %p91
      %p93 = scmp.ne.s32.totalorder %s81, %s82
      %p94 = scmp.eq.s32.totalorder %s25, 1
      %p95 = por %p93, %p94
      %p97 = scmp.ne.s32.totalorder %s82, %s96
      %p98 = scmp.eq.s32.totalorder %s25, 0
      %p99 = por %p97, %p98
      %s101 = sadd.s32 %s100, 1
      %p104 = scmp.eq.s32.totalorder %s19, 1
      %p105 = scmp.ne.s32.totalorder %s100, %s102
      %p106 = scmp.eq.s32.totalorder %s19, 0
      %p107 = por %p105, %p106
      %p108 = scmp.ne.s32.totalorder %s100, %s102
      %p109 = scmp.eq.s32.totalorder %s24, 1
      %p110 = por %p108, %p109
      %p111 = scmp.ne.s32.totalorder %s102, %s103
      %p112 = scmp.eq.s32.totalorder %s24, 0
      %p113 = por %p111, %p112
      %p114 = scmp.ne.s32.totalorder %s102, %s103
      %p115 = scmp.eq.s32.totalorder %s25, 1
      %p116 = por %p114, %p115
      %p118 = scmp.ne.s32.totalorder %s103, %s117
      %p119 = scmp.eq.s32.totalorder %s25, 0
      %p120 = por %p118, %p119
      %s121 = ssub.s32 %s19, %s26
      %p122 = scmp.eq.s32.totalorder %s121, 0
      %s124 = sadd.s32 %s123, 1
      %s125 = scalar_select %p122, %s123, %s124
      %p128 = pneg %p122
      %p129 = scmp.eq.s32.totalorder %s19, 1
      %p130 = por %p128, %p129
      %p131 = scmp.ne.s32.totalorder %s123, %s126
      %p132 = scmp.eq.s32.totalorder %s19, 0
      %p133 = por %p131, %p132
      %p134 = scmp.ne.s32.totalorder %s123, %s126
      %p135 = scmp.eq.s32.totalorder %s24, 1
      %p136 = por %p134, %p135
      %p137 = scmp.ne.s32.totalorder %s126, %s127
      %p138 = scmp.eq.s32.totalorder %s24, 0
      %p139 = por %p137, %p138
      %p140 = scmp.ne.s32.totalorder %s126, %s127
      %p141 = scmp.eq.s32.totalorder %s25, 1
      %p142 = por %p140, %p141
      %p144 = scmp.ne.s32.totalorder %s127, %s143
      %p145 = scmp.eq.s32.totalorder %s25, 0
      %p146 = por %p144, %p145
      %s147 = ssub.s32 %s19, %s26
      %p148 = scmp.eq.s32.totalorder %s147, 0
      %s150 = sadd.s32 %s149, 1
      %s151 = scalar_select %p148, %s149, %s150
      %p154 = pneg %p148
      %p155 = scmp.eq.s32.totalorder %s19, 1
      %p156 = por %p154, %p155
      %p157 = scmp.ne.s32.totalorder %s149, %s152
      %p158 = scmp.eq.s32.totalorder %s19, 0
      %p159 = por %p157, %p158
      %p160 = scmp.ne.s32.totalorder %s149, %s152
      %p161 = scmp.eq.s32.totalorder %s24, 1
      %p162 = por %p160, %p161
      %p163 = scmp.ne.s32.totalorder %s152, %s153
      %p164 = scmp.eq.s32.totalorder %s24, 0
      %p165 = por %p163, %p164
      %p166 = scmp.ne.s32.totalorder %s152, %s153
      %p167 = scmp.eq.s32.totalorder %s25, 1
      %p168 = por %p166, %p167
      %p170 = scmp.ne.s32.totalorder %s153, %s169
      %p171 = scmp.eq.s32.totalorder %s25, 0
      %p172 = por %p170, %p171
      %s173 = ssub.s32 %s19, %s26
      %p174 = scmp.eq.s32.totalorder %s173, 0
      %s176 = sadd.s32 %s175, 1
      %s177 = scalar_select %p174, %s175, %s176
      %p180 = pneg %p174
      %p181 = scmp.eq.s32.totalorder %s19, 1
      %p182 = por %p180, %p181
      %p183 = scmp.ne.s32.totalorder %s175, %s178
      %p184 = scmp.eq.s32.totalorder %s19, 0
      %p185 = por %p183, %p184
      %p186 = scmp.ne.s32.totalorder %s175, %s178
      %p187 = scmp.eq.s32.totalorder %s24, 1
      %p188 = por %p186, %p187
      %p189 = scmp.ne.s32.totalorder %s178, %s179
      %p190 = scmp.eq.s32.totalorder %s24, 0
      %p191 = por %p189, %p190
      %p192 = scmp.ne.s32.totalorder %s178, %s179
      %p193 = scmp.eq.s32.totalorder %s25, 1
      %p194 = por %p192, %p193
      %p196 = scmp.ne.s32.totalorder %s179, %s195
      %p197 = scmp.eq.s32.totalorder %s25, 0
      %p198 = por %p196, %p197
      %p199 = scmp.le.s32.totalorder 1, %s19
      %p200 = scmp.lt.s32.totalorder %s19, 3
      %p201 = pnand %p199, %p200
      %p202 = pneg %p201
      // Predicated region
      $region9: #{tpu_custom_call.1} parent=5 // pred_check
        _
      $region10: #{tpu_custom_call.1} parent=5 // pred_check_branch
        %204 = sbr.rel (%p201) target = $region12
      $region11: #{tpu_custom_call.1} parent=5 // pred_region
        %s205 = ssub.s32 %s19, 1
        // Predicated region
        $region13: #{tpu_custom_call.1} parent=11 // pred_check
          %p206 = pneg %p92
        $region14: #{tpu_custom_call.1} parent=11 // pred_check_branch
          %208 = sbr.rel (%p206) target = $region16
        $region15: #{tpu_custom_call.1} parent=11 // pred_region
          _
        $region16: #{tpu_custom_call.1} parent=11 // pred_fallthru
          _
        // Predicated region
        $region17: #{tpu_custom_call.1} parent=11 // pred_check
          %p209 = pneg %p113
        $region18: #{tpu_custom_call.1} parent=11 // pred_check_branch
          %211 = sbr.rel (%p209) target = $region20
        $region19: #{tpu_custom_call.1} parent=11 // pred_region
          _
        $region20: #{tpu_custom_call.1} parent=11 // pred_fallthru
          _
      $region12: #{tpu_custom_call.1} parent=5 // pred_fallthru
        _
      %p212 = scmp.lt.s32.totalorder %s19, 2
      // Predicated region
      $region21: #{tpu_custom_call.1} parent=5 // pred_check
        %p213 = pneg %p212
      $region22: #{tpu_custom_call.1} parent=5 // pred_check_branch
        %215 = sbr.rel (%p213) target = $region24
      $region23: #{tpu_custom_call.1} parent=5 // pred_region
        // Predicated region
        $region25: #{tpu_custom_call.1} parent=23 // pred_check
          %p216 = pneg %p39
        $region26: #{tpu_custom_call.1} parent=23 // pred_check_branch
          %218 = sbr.rel (%p216) target = $region28
        $region27: #{tpu_custom_call.1} parent=23 // pred_region
          %p219 = scmp.lt.s32.totalorder %s19, 1
          %s220 = scalar_select %p219, %s19, 1
          %s221 = smul.addr %s220, 2
          %s222 = smul.addr %s221, 8
          %s223 = scalar_lea.vmem %s0, %s222
        $region28: #{tpu_custom_call.1} parent=23 // pred_fallthru
          _
        // Predicated region
        $region29: #{tpu_custom_call.1} parent=23 // pred_check
          %p224 = pneg %p65
        $region30: #{tpu_custom_call.1} parent=23 // pred_check_branch
          %226 = sbr.rel (%p224) target = $region32
        $region31: #{tpu_custom_call.1} parent=23 // pred_region
          %p227 = scmp.lt.s32.totalorder %s19, 1
          %s228 = scalar_select %p227, %s19, 1
          %s229 = smul.addr %s228, 2
          %s230 = smul.addr %s229, 8
          %s231 = scalar_lea.vmem %s1, %s230
        $region32: #{tpu_custom_call.1} parent=23 // pred_fallthru
          _
      $region24: #{tpu_custom_call.1} parent=5 // pred_fallthru
        _
      %p232 = scmp.le.s32.totalorder 1, %s19
      %p233 = scmp.lt.s32.totalorder %s19, 3
      %p234 = pnand %p232, %p233
      %p235 = pneg %p234
      // Predicated region
      $region33: #{tpu_custom_call.1} parent=5 // pred_check
        _
      $region34: #{tpu_custom_call.1} parent=5 // pred_check_branch
        %237 = sbr.rel (%p234) target = $region36
      $region35: #{tpu_custom_call.1} parent=5 // pred_region
        %s238 = ssub.s32 %s19, 1
        %p239 = scmp.lt.s32.totalorder %s24, 1
        %s240 = scalar_select %p239, %s24, 1
        %s241 = smul.addr %s240, 2
        %s242 = smul.addr %s241, 8
        %s243 = scalar_lea.vmem %s0, %s242
        %p244 = pneg %p45
        %p245 = pneg %p42
        %p246 = scmp.lt.s32.totalorder %s24, 1
        %s247 = scalar_select %p246, %s24, 1
        %s248 = smul.addr %s247, 2
        %s249 = smul.addr %s248, 8
        %s250 = scalar_lea.vmem %s1, %s249
        %p251 = pneg %p71
        %p252 = pneg %p68
        %p253 = pneg %p92
        %p254 = pneg %p89
        %p255 = pneg %p113
        %p256 = pneg %p110
        %p257 = pneg %p139
        %p258 = pneg %p136
        %s259 = sand.u32 %s126, 1
        %s260 = scalar_lea.sflag [#allocation3], %s259
        %s261 = sand.u32 %s126, 1
        %s262 = smul.addr %s261, 8
        %s263 = scalar_lea.vmem [#allocation2], %s262
        %p264 = pneg %p165
        %p265 = pneg %p162
        %s266 = sand.u32 %s24, 1
        %s267 = scalar_lea.sflag [#allocation5], %s266
        %s268 = sand.u32 %s152, 1
        %s269 = scalar_lea.vmem [#allocation4], %s268
        %p270 = pneg %p191
        %p271 = pneg %p188
        %s272 = sand.u32 %s24, 1
        %s273 = scalar_lea.sflag [#allocation5], %s272
        %s274 = sand.u32 %s178, 1
        %s275 = scalar_lea.vmem [#allocation6], %s274
        %p276 = scmp.lt.s32.totalorder %s24, 1
        %s277 = scalar_select %p276, %s24, 1
        %s278 = smul.addr %s277, 2
        %s279 = smul.addr %s278, 8
        %s280 = scalar_lea.vmem %s0, %s279
        %p281 = scmp.lt.s32.totalorder %s24, 1
        %s282 = scalar_select %p281, %s24, 1
        %s283 = smul.addr %s282, 2
        %s284 = smul.addr %s283, 8
        %s285 = scalar_lea.vmem %s1, %s284
        %v286 = vld [vmem:[%s2] sm:$0xff]
        %v287 = vld [vmem:[%s2 + $0x8] sm:$0xff]
        %v288 = vld [vmem:[%s3] sm:$0x1]
        %v289 = vld [vmem:[%s280] sm:$0xff]
        %v290 = vld [vmem:[%s280 + $0x8] sm:$0xff]
        %vm291 = vcmask 31744
        %v292 = vsel %vm291, %v289, 0.0
        %v293 = vsel %vm291, %v290, 0.0
        %v294 = vadd.f32 %v292, %v293
        %v295 = vrot.slane %v294, 4
        %v296 = vadd.f32 %v294, %v295
        %v297 = vrot.slane %v296, 2
        %v298 = vadd.f32 %v296, %v297
        %v299 = vrot.slane %v298, 1
        %v300 = vadd.f32 %v298, %v299
        %v301 = vrcp.pop 16.0
        %v302 = vmul.f32 %v300, %v301
        %v303 = vsub.f32 %v289, %v302
        %v304 = vsub.f32 %v290, %v302
        %v305 = vmul.f32 %v303, %v303
        %v306 = vmul.f32 %v304, %v304
        %v307 = vsel %vm291, %v305, 0.0
        %v308 = vsel %vm291, %v306, 0.0
        %v309 = vadd.f32 %v307, %v308
        %v310 = vrot.slane %v309, 4
        %v311 = vadd.f32 %v309, %v310
        %v312 = vrot.slane %v311, 2
        %v313 = vadd.f32 %v311, %v312
        %v314 = vrot.slane %v313, 1
        %v315 = vadd.f32 %v313, %v314
        %v316 = vmul.f32 %v315, %v301
        %v317 = vadd.f32 %v316, 1e-05
        %v318 = vrsqrt.pop %v317
        %v319 = vmul.f32 %v317, %v318
        %vm320 = vcmp.eq.f32.partialorder %v317, inf
        %v321 = vsel %vm320, %v317, %v319
        %vm322 = vcmp.eq.f32.partialorder %v317, 0.0
        %v323 = vand.u32 %v317, 2147483648
        %v324 = vsel %vm322, %v323, %v321
        %vm325 = vcmask 24576
        %326 = vst.msk [vmem:[%s269] sm:$0x1] %vm325, %v302
        %327 = vst.msk [vmem:[%s275] sm:$0x1] %vm325, %v324
        %v328 = vrcp.pop %v324
        %v329 = vmul.f32 %v303, %v328
        %v330 = vmul.f32 %v304, %v328
        %v332 = vlaneseq
        %v333 = vshrl.u32 %v332, 7
        %v334 = vsub.s32 0, %v333
        %v335 = vrot.slane %v288, %v334
        %337 = vxpose.xlu0.b32.start [1/16] %v329, 128
        %338 = vxpose.xlu0.b32.cont [2/16] %v330, 128
        %339 = vxpose.xlu0.b32.cont [3/16] 0.0, 128
        %340 = vxpose.xlu0.b32.cont [4/16] 0.0, 128
        %341 = vxpose.xlu0.b32.cont [5/16] 0.0, 128
        %342 = vxpose.xlu0.b32.cont [6/16] 0.0, 128
        %343 = vxpose.xlu0.b32.cont [7/16] 0.0, 128
        %344 = vxpose.xlu0.b32.cont [8/16] 0.0, 128
        %345 = vxpose.xlu0.b32.cont [9/16] 0.0, 128
        %346 = vxpose.xlu0.b32.cont [10/16] 0.0, 128
        %347 = vxpose.xlu0.b32.cont [11/16] 0.0, 128
        %348 = vxpose.xlu0.b32.cont [12/16] 0.0, 128
        %349 = vxpose.xlu0.b32.cont [13/16] 0.0, 128
        %350 = vxpose.xlu0.b32.cont [14/16] 0.0, 128
        %351 = vxpose.xlu0.b32.cont [15/16] 0.0, 128
        %352 = vxpose.xlu0.b32.end [16/16] 0.0, 128
        %v353 = vpop.trf.xlu0
        %v354 = vpop.trf.xlu0
        %v355 = vpop.trf.xlu0
        %v356 = vpop.trf.xlu0
        %v357 = vpop.trf.xlu0
        %v358 = vpop.trf.xlu0
        %v359 = vpop.trf.xlu0
        %v360 = vpop.trf.xlu0
        %v361 = vpop.trf.xlu0
        %v362 = vpop.trf.xlu0
        %v363 = vpop.trf.xlu0
        %v364 = vpop.trf.xlu0
        %v365 = vpop.trf.xlu0
        %v366 = vpop.trf.xlu0
        %v367 = vpop.trf.xlu0
        %v368 = vpop.trf.xlu0
        %vm369 = vcmask 130048
        %v371 = vsel %vm369, %v353, 0
        %373 = vmatprep.subr.mxu0 0.0
        %374 = vmatpush1.msra.mxu0 %v286
        %375 = vmatprep.subr.mxu0 0.0
        %376 = vmatpush1.msra.mxu0 %v287
        %377 = vmatprep.subr.mxu0 0.0
        %378 = vmatpush1.msra.mxu0 0.0
        %379 = vmatprep.subr.mxu0 0.0
        %380 = vmatpush1.msra.mxu0 0.0
        %381 = vmatprep.subr.mxu0 0.0
        %382 = vmatpush1.msra.mxu0 0.0
        %383 = vmatprep.subr.mxu0 0.0
        %384 = vmatpush1.msra.mxu0 0.0
        %385 = vmatprep.subr.mxu0 0.0
        %386 = vmatpush1.msra.mxu0 0.0
        %387 = vmatprep.subr.mxu0 0.0
        %388 = vmatpush1.msra.mxu0 0.0
        %389 = vmatprep.subr.mxu0 0.0
        %390 = vmatpush1.msra.mxu0 0.0
        %391 = vmatprep.subr.mxu0 0.0
        %392 = vmatpush1.msra.mxu0 0.0
        %393 = vmatprep.subr.mxu0 0.0
        %394 = vmatpush1.msra.mxu0 0.0
        %395 = vmatprep.subr.mxu0 0.0
        %396 = vmatpush1.msra.mxu0 0.0
        %397 = vmatprep.subr.mxu0 0.0
        %398 = vmatpush1.msra.mxu0 0.0
        %399 = vmatprep.subr.mxu0 0.0
        %400 = vmatpush1.msra.mxu0 0.0
        %401 = vmatprep.subr.mxu0 0.0
        %402 = vmatpush1.msra.mxu0 0.0
        %403 = vmatprep.subr.mxu0 0.0
        %404 = vmatpush1.msra.mxu0 0.0
        %405 = vmatprep.subr.mxu0 0.0
        %406 = vmatpush1.msra.mxu0 0.0
        %407 = vmatprep.subr.mxu0 0.0
        %408 = vmatpush1.msra.mxu0 0.0
        %409 = vmatprep.subr.mxu0 0.0
        %410 = vmatpush1.msra.mxu0 0.0
        %411 = vmatprep.subr.mxu0 0.0
        %412 = vmatpush1.msra.mxu0 0.0
        %413 = vmatprep.subr.mxu0 0.0
        %414 = vmatpush1.msra.mxu0 0.0
        %415 = vmatprep.subr.mxu0 0.0
        %416 = vmatpush1.msra.mxu0 0.0
        %417 = vmatprep.subr.mxu0 0.0
        %418 = vmatpush1.msra.mxu0 0.0
        %419 = vmatprep.subr.mxu0 0.0
        %420 = vmatpush1.msra.mxu0 0.0
        %421 = vmatprep.subr.mxu0 0.0
        %422 = vmatpush1.msra.mxu0 0.0
        %423 = vmatprep.subr.mxu0 0.0
        %424 = vmatpush1.msra.mxu0 0.0
        %425 = vmatprep.subr.mxu0 0.0
        %426 = vmatpush1.msra.mxu0 0.0
        %427 = vmatprep.subr.mxu0 0.0
        %428 = vmatpush1.msra.mxu0 0.0
        %429 = vmatprep.subr.mxu0 0.0
        %430 = vmatpush1.msra.mxu0 0.0
        %431 = vmatprep.subr.mxu0 0.0
        %432 = vmatpush1.msra.mxu0 0.0
        %433 = vmatprep.subr.mxu0 0.0
        %434 = vmatpush1.msra.mxu0 0.0
        %435 = vmatprep.subr.mxu0 0.0
        %436 = vmatpush1.msra.mxu0 0.0
        %437 = vmatprep.mubr.f32.mxu0 0.0
        %438 = vmatmul.mubr.f32.gmra.mrb[0].mxu0 %v371
        %v439 = vpop.f32.mrb[0].mxu0
        %v440 = vadd.f32 %v335, %v439
        %v441 = vpop.f32.mrb[0].mxu0
        %442 = vdwg.mxu0
        %vm443 = vcmask 257024
        %444 = vst.msk [vmem:[%s263] sm:$0xf] %vm443, %v440
        %v445 = vld [vmem:[%s285] sm:$0xff]
        %v446 = vld [vmem:[%s285 + $0x8] sm:$0xff]
        %447 = vxpose.xlu0.b32.start [1/16] %v445, 128
        %448 = vxpose.xlu0.b32.cont [2/16] %v446, 128
        %449 = vxpose.xlu0.b32.cont [3/16] 0.0, 128
        %450 = vxpose.xlu0.b32.cont [4/16] 0.0, 128
        %451 = vxpose.xlu0.b32.cont [5/16] 0.0, 128
        %452 = vxpose.xlu0.b32.cont [6/16] 0.0, 128
        %453 = vxpose.xlu0.b32.cont [7/16] 0.0, 128
        %454 = vxpose.xlu0.b32.cont [8/16] 0.0, 128
        %455 = vxpose.xlu0.b32.cont [9/16] 0.0, 128
        %456 = vxpose.xlu0.b32.cont [10/16] 0.0, 128
        %457 = vxpose.xlu0.b32.cont [11/16] 0.0, 128
        %458 = vxpose.xlu0.b32.cont [12/16] 0.0, 128
        %459 = vxpose.xlu0.b32.cont [13/16] 0.0, 128
        %460 = vxpose.xlu0.b32.cont [14/16] 0.0, 128
        %461 = vxpose.xlu0.b32.cont [15/16] 0.0, 128
        %462 = vxpose.xlu0.b32.end [16/16] 0.0, 128
        %v463 = vpop.trf.xlu0
        %v464 = vpop.trf.xlu0
        %v465 = vpop.trf.xlu0
        %v466 = vpop.trf.xlu0
        %v467 = vpop.trf.xlu0
        %v468 = vpop.trf.xlu0
        %v469 = vpop.trf.xlu0
        %v470 = vpop.trf.xlu0
        %v471 = vpop.trf.xlu0
        %v472 = vpop.trf.xlu0
        %v473 = vpop.trf.xlu0
        %v474 = vpop.trf.xlu0
        %v475 = vpop.trf.xlu0
        %v476 = vpop.trf.xlu0
        %v477 = vpop.trf.xlu0
        %v478 = vpop.trf.xlu0
        %v480 = vsel %vm369, %v463, 0
        %482 = vmatprep.subr.mxu0 0.0
        %483 = vmatpush1.msra.mxu0 %v286
        %484 = vmatprep.subr.mxu0 0.0
        %485 = vmatpush1.msra.mxu0 %v287
        %486 = vmatprep.subr.mxu0 0.0
        %487 = vmatpush1.msra.mxu0 0.0
        %488 = vmatprep.subr.mxu0 0.0
        %489 = vmatpush1.msra.mxu0 0.0
        %490 = vmatprep.subr.mxu0 0.0
        %491 = vmatpush1.msra.mxu0 0.0
        %492 = vmatprep.subr.mxu0 0.0
        %493 = vmatpush1.msra.mxu0 0.0
        %494 = vmatprep.subr.mxu0 0.0
        %495 = vmatpush1.msra.mxu0 0.0
        %496 = vmatprep.subr.mxu0 0.0
        %497 = vmatpush1.msra.mxu0 0.0
        %498 = vmatprep.subr.mxu0 0.0
        %499 = vmatpush1.msra.mxu0 0.0
        %500 = vmatprep.subr.mxu0 0.0
        %501 = vmatpush1.msra.mxu0 0.0
        %502 = vmatprep.subr.mxu0 0.0
        %503 = vmatpush1.msra.mxu0 0.0
        %504 = vmatprep.subr.mxu0 0.0
        %505 = vmatpush1.msra.mxu0 0.0
        %506 = vmatprep.subr.mxu0 0.0
        %507 = vmatpush1.msra.mxu0 0.0
        %508 = vmatprep.subr.mxu0 0.0
        %509 = vmatpush1.msra.mxu0 0.0
        %510 = vmatprep.subr.mxu0 0.0
        %511 = vmatpush1.msra.mxu0 0.0
        %512 = vmatprep.subr.mxu0 0.0
        %513 = vmatpush1.msra.mxu0 0.0
        %514 = vmatprep.subr.mxu0 0.0
        %515 = vmatpush1.msra.mxu0 0.0
        %516 = vmatprep.subr.mxu0 0.0
        %517 = vmatpush1.msra.mxu0 0.0
        %518 = vmatprep.subr.mxu0 0.0
        %519 = vmatpush1.msra.mxu0 0.0
        %520 = vmatprep.subr.mxu0 0.0
        %521 = vmatpush1.msra.mxu0 0.0
        %522 = vmatprep.subr.mxu0 0.0
        %523 = vmatpush1.msra.mxu0 0.0
        %524 = vmatprep.subr.mxu0 0.0
        %525 = vmatpush1.msra.mxu0 0.0
        %526 = vmatprep.subr.mxu0 0.0
        %527 = vmatpush1.msra.mxu0 0.0
        %528 = vmatprep.subr.mxu0 0.0
        %529 = vmatpush1.msra.mxu0 0.0
        %530 = vmatprep.subr.mxu0 0.0
        %531 = vmatpush1.msra.mxu0 0.0
        %532 = vmatprep.subr.mxu0 0.0
        %533 = vmatpush1.msra.mxu0 0.0
        %534 = vmatprep.subr.mxu0 0.0
        %535 = vmatpush1.msra.mxu0 0.0
        %536 = vmatprep.subr.mxu0 0.0
        %537 = vmatpush1.msra.mxu0 0.0
        %538 = vmatprep.subr.mxu0 0.0
        %539 = vmatpush1.msra.mxu0 0.0
        %540 = vmatprep.subr.mxu0 0.0
        %541 = vmatpush1.msra.mxu0 0.0
        %542 = vmatprep.subr.mxu0 0.0
        %543 = vmatpush1.msra.mxu0 0.0
        %544 = vmatprep.subr.mxu0 0.0
        %545 = vmatpush1.msra.mxu0 0.0
        %546 = vmatprep.mubr.f32.mxu0 0.0
        %547 = vmatmul.mubr.f32.gmra.mrb[0].mxu0 %v480
        %v548 = vpop.f32.mrb[0].mxu0
        %v549 = vadd.f32 %v335, %v548
        %v550 = vpop.f32.mrb[0].mxu0
        %551 = vdwg.mxu0
        %552 = vst.msk [vmem:[%s263 + $0x4] sm:$0xf] %vm443, %v549
        %s553 = sand.u32 %s126, 1
        %s554 = scalar_lea.sflag [#allocation3], %s553
        %s555 = sand.u32 %s126, 1
        %s556 = smul.addr %s555, 8
        %s557 = scalar_lea.vmem [#allocation2], %s556
        %s558 = sand.u32 %s24, 1
        %s559 = scalar_lea.sflag [#allocation5], %s558
        %s560 = sand.u32 %s152, 1
        %s561 = scalar_lea.vmem [#allocation4], %s560
        %s562 = sand.u32 %s24, 1
        %s563 = scalar_lea.sflag [#allocation5], %s562
        %s564 = sand.u32 %s178, 1
        %s565 = scalar_lea.vmem [#allocation6], %s564
        // Predicated region
        $region37: #{tpu_custom_call.1} parent=35 // pred_check
          %p566 = pneg %p136
        $region38: #{tpu_custom_call.1} parent=35 // pred_check_branch
          %568 = sbr.rel (%p566) target = $region40
        $region39: #{tpu_custom_call.1} parent=35 // pred_region
          %s570 = ssub.s32 128, 128
          %571 = vsyncadd %s554, %s570
          %s572 = smul.addr %s24, 128
          %s573 = scalar_lea.hbm %s4, %s572
          %s575 = sshll.u32 %s557, 4
          %s576 = int_to_ptr.vmem [resolvable:$true] %s575
          %578 = dma.vmem_to_hbm [thread:$0]  %s576, 128, %s573, %s554
        $region40: #{tpu_custom_call.1} parent=35 // pred_fallthru
          _
        // Predicated region
        $region41: #{tpu_custom_call.1} parent=35 // pred_check
          %p579 = pneg %p162
        $region42: #{tpu_custom_call.1} parent=35 // pred_check_branch
          %581 = sbr.rel (%p579) target = $region44
        $region43: #{tpu_custom_call.1} parent=35 // pred_region
          %s583 = ssub.s32 16, 16
          %584 = vsyncadd %s559, %s583
          %s585 = smul.addr %s24, 16
          %s586 = scalar_lea.hbm %s5, %s585
          %s588 = sshll.u32 %s561, 4
          %s589 = int_to_ptr.vmem [resolvable:$true] %s588
          %591 = dma.vmem_to_hbm [thread:$0]  %s589, 16, %s586, %s559
        $region44: #{tpu_custom_call.1} parent=35 // pred_fallthru
          _
        // Predicated region
        $region45: #{tpu_custom_call.1} parent=35 // pred_check
          %p592 = pneg %p188
        $region46: #{tpu_custom_call.1} parent=35 // pred_check_branch
          %594 = sbr.rel (%p592) target = $region48
        $region47: #{tpu_custom_call.1} parent=35 // pred_region
          %s596 = ssub.s32 16, 16
          %597 = vsyncadd %s563, %s596
          %s598 = smul.addr %s24, 16
          %s599 = scalar_lea.hbm %s6, %s598
          %s601 = sshll.u32 %s565, 4
          %s602 = int_to_ptr.vmem [resolvable:$true] %s601
          %604 = dma.vmem_to_hbm [thread:$0]  %s602, 16, %s599, %s563
        $region48: #{tpu_custom_call.1} parent=35 // pred_fallthru
          _
      $region36: #{tpu_custom_call.1} parent=5 // pred_fallthru
        _
      %p605 = scmp.le.s32.totalorder 2, %s19
      // Predicated region
      $region49: #{tpu_custom_call.1} parent=5 // pred_check
        %p606 = pneg %p605
      $region50: #{tpu_custom_call.1} parent=5 // pred_check_branch
        %608 = sbr.rel (%p606) target = $region52
      $region51: #{tpu_custom_call.1} parent=5 // pred_region
        %s609 = ssub.s32 %s19, 2
        // Predicated region
        $region53: #{tpu_custom_call.1} parent=51 // pred_check
          %p610 = pneg %p142
        $region54: #{tpu_custom_call.1} parent=51 // pred_check_branch
          %612 = sbr.rel (%p610) target = $region56
        $region55: #{tpu_custom_call.1} parent=51 // pred_region
          %s613 = sand.u32 %s127, 1
          %s614 = scalar_lea.sflag [#allocation3], %s613
          %s615 = sand.u32 %s127, 1
          %s616 = smul.addr %s615, 8
          %s617 = scalar_lea.vmem [#allocation2], %s616
          %618 = dma.done %s614, 128
        $region56: #{tpu_custom_call.1} parent=51 // pred_fallthru
          _
        // Predicated region
        $region57: #{tpu_custom_call.1} parent=51 // pred_check
          %p619 = pneg %p168
        $region58: #{tpu_custom_call.1} parent=51 // pred_check_branch
          %621 = sbr.rel (%p619) target = $region60
        $region59: #{tpu_custom_call.1} parent=51 // pred_region
          %s622 = sand.u32 %s25, 1
          %s623 = scalar_lea.sflag [#allocation5], %s622
          %s624 = sand.u32 %s153, 1
          %s625 = scalar_lea.vmem [#allocation4], %s624
          %626 = dma.done %s623, 16
        $region60: #{tpu_custom_call.1} parent=51 // pred_fallthru
          _
        // Predicated region
        $region61: #{tpu_custom_call.1} parent=51 // pred_check
          %p627 = pneg %p194
        $region62: #{tpu_custom_call.1} parent=51 // pred_check_branch
          %629 = sbr.rel (%p627) target = $region64
        $region63: #{tpu_custom_call.1} parent=51 // pred_region
          %s630 = sand.u32 %s25, 1
          %s631 = scalar_lea.sflag [#allocation5], %s630
          %s632 = sand.u32 %s179, 1
          %s633 = scalar_lea.vmem [#allocation6], %s632
          %634 = dma.done %s631, 16
        $region64: #{tpu_custom_call.1} parent=51 // pred_fallthru
          _
      $region52: #{tpu_custom_call.1} parent=5 // pred_fallthru
        _
    $region6: #{tpu_custom_call.1} parent=1 // loop_footer
      %s23 = sadd.s32 1, %s19
    $region7: #{tpu_custom_call.1} parent=1 // loop_footer_branch
      %18 = sbr.rel target = $region3
    $region8: #{tpu_custom_call.1} parent=1 // loop_exit
      _
    %635 = vsyncpa [#allocation3], 1
    %s636 = scalar_lea.sflag [#allocation3], 1
    %637 = vsyncpa %s636, 1
    %638 = vsyncpa [#allocation5], 1
    %s639 = scalar_lea.sflag [#allocation5], 1
    %640 = vsyncpa %s639, 1

</llo_original>
